<compile_context>
chip_gen: v6e
topology: v6e:2x2x1
jax: 0.10.0
libtpu: 0.0.40
codegen_flags: <defaults>
</compile_context>

<pallas_src>
import jax
import jax.numpy as jnp
from jax.experimental import pallas as pl
from jax.experimental.pallas import tpu as pltpu


def _make_ce_partial_kernel(rows_total, tile_r, num_classes, mask_row_tail):
    def kernel(pred_ref, label_ref, out_ref):
        # pred_ref : (tile_r, C)  logits in their native dtype
        # label_ref: (tile_r, 1)  int32 targets
        # out_ref  : (1, 1)       f32 partial sum of row losses for this tile
        x = pred_ref[...]                                    # (tile_r, C)
        labels = label_ref[...]                              # (tile_r, 1)

        # Row max + label pick in the input dtype (max/compare/select exact).
        m = jnp.max(x, axis=-1, keepdims=True)               # (tile_r, 1)
        col_ids = jax.lax.broadcasted_iota(jnp.int32, (1, num_classes), 1)
        picked = jnp.sum(jnp.where(col_ids == labels, x, 0),
                         axis=-1, keepdims=True)             # (tile_r, 1)

        # f32 logsumexp path; (x - m) is single-use and fuses into exp.
        m32 = m.astype(jnp.float32)
        sumexp = jnp.sum(jnp.exp(x.astype(jnp.float32) - m32),
                         axis=-1, keepdims=True)             # (tile_r, 1)
        row_loss = (m32 + jnp.log(sumexp)) - picked.astype(jnp.float32)

        valid = labels >= 0                                  # (tile_r, 1)
        if mask_row_tail:
            row_ids = (jax.lax.broadcasted_iota(jnp.int32, (tile_r, 1), 0)
                       + pl.program_id(0) * tile_r)
            valid = valid & (row_ids < rows_total)

        masked = jnp.where(valid, row_loss, 0.0)             # (tile_r, 1)
        out_ref[...] = jnp.sum(masked, axis=0, keepdims=True)  # (1, 1)

    return kernel


def _vmem_budget():
    """Return (target_input_tile_bytes, vmem_limit_bytes) per TPU generation."""
    vmem_cap = None
    try:
        info = pltpu.get_tpu_info()
        for name in ("vmem_capacity_bytes", "vmem_size_bytes", "vmem_bytes"):
            v = getattr(info, name, None)
            if isinstance(v, int) and v > 0:
                vmem_cap = v
                break
    except Exception:
        vmem_cap = None
    if vmem_cap is not None and vmem_cap >= 96 * 1024 * 1024:
        # v5e / v6e: 128 MiB VMEM -> large tiles, generous scoped limit.
        return 8 * 1024 * 1024, 64 * 1024 * 1024
    # v7x (64 MiB VMEM) or unknown: keep the live set small.
    return 3 * 1024 * 1024, 32 * 1024 * 1024


def cross_entropy_criterion(predict, label):
    """predict: (N, L, C) float, label: (N, L) int -> scalar mean CE loss."""
    n, l, c = predict.shape
    r = n * l
    pred2d = predict.reshape(r, c)                 # native dtype, no pad/copy
    lab2d = label.reshape(r, 1).astype(jnp.int32)

    itemsize = jnp.dtype(pred2d.dtype).itemsize
    target_tile_bytes, vmem_limit = _vmem_budget()

    bytes_per_row = max(1, c * itemsize)
    tile_r = (target_tile_bytes // bytes_per_row) // 8 * 8
    tile_r = max(8, tile_r)
    if tile_r >= r:
        tile_r = r                                  # one block == full row dim
    num_tiles = (r + tile_r - 1) // tile_r
    mask_row_tail = (num_tiles * tile_r) != r       # partial last tile?

    kernel = _make_ce_partial_kernel(r, tile_r, c, mask_row_tail)

    partials = pl.pallas_call(
        kernel,
        out_shape=jax.ShapeDtypeStruct((num_tiles, 1), jnp.float32),
        grid=(num_tiles,),
        in_specs=[
            pl.BlockSpec((tile_r, c), lambda i: (i, 0)),
            pl.BlockSpec((tile_r, 1), lambda i: (i, 0)),
        ],
        out_specs=pl.BlockSpec((1, 1), lambda i: (i, 0)),
        compiler_params=pltpu.CompilerParams(
            dimension_semantics=("parallel",),
            vmem_limit_bytes=vmem_limit,
        ),
        cost_estimate=pl.CostEstimate(
            flops=6 * r * c,
            transcendentals=r * c,
            bytes_accessed=r * c * itemsize + r * 4 + num_tiles * 4,
        ),
    )(pred2d, lab2d)

    # Tiny final reduction over num_tiles partial sums; denominator is the
    # true row count.
    return jnp.sum(partials) / jnp.float32(r)


def _reference(predict, label):
    # pure-JAX reference for sanity check
    logp = jax.nn.log_softmax(predict.astype(jnp.float32), axis=-1)  # (N, L, C)
    nll = -jnp.take_along_axis(logp, label[..., None].astype(jnp.int32),
                               axis=-1)[..., 0]
    return jnp.mean(nll)


if __name__ == "__main__":
    key = jax.random.PRNGKey(0)
    k1, k2 = jax.random.split(key)

    N, L, C = 2, 8, 32                      # predict (N, L, C), label (N, L)
    predict = jax.random.normal(k1, (N, L, C), dtype=jnp.float32)
    label = jax.random.randint(k2, (N, L), 0, C, dtype=jnp.int32)

    loss = cross_entropy_criterion(predict, label)
    loss = jax.block_until_ready(loss)

    ref = _reference(predict, label)
    assert jnp.allclose(loss, ref, rtol=1e-5, atol=1e-5), (loss, ref)
    print("KERNEL_OK")
</pallas_src>

<mosaic_0001>
module attributes {stable_mosaic.version = 11 : i64} {
  func.func @kernel(%arg0: i32, %arg1: memref<16x32xf32, #tpu.memory_space<vmem>>, %arg2: memref<16x1xi32, #tpu.memory_space<vmem>>, %arg3: memref<1x1xf32, #tpu.memory_space<vmem>>) attributes {dimension_semantics = [#tpu.dimension_semantics<parallel>], iteration_bounds = array<i64: 1>, scalar_prefetch = 0 : i64, scratch_operands = 0 : i64, tpu.core_type = #tpu.core_type<tc>, window_params = [{transform_indices = @transform_0, window_bounds = array<i64: 16, 32>}, {transform_indices = @transform_1, window_bounds = array<i64: 16, 1>}, {transform_indices = @transform_2, window_bounds = array<i64: 1, 1>}]} {
    %c0 = arith.constant 0 : index
    %c0_0 = arith.constant 0 : index
    %0 = vector.load %arg1[%c0, %c0_0] : memref<16x32xf32, #tpu.memory_space<vmem>>, vector<16x32xf32>
    %c0_1 = arith.constant 0 : index
    %c0_2 = arith.constant 0 : index
    %1 = vector.load %arg2[%c0_1, %c0_2] : memref<16x1xi32, #tpu.memory_space<vmem>>, vector<16x1xi32>
    %cst = arith.constant dense<0xFF800000> : vector<16xf32>
    %2 = vector.multi_reduction <maximumf>, %0, %cst [1] : vector<16x32xf32> to vector<16xf32>
    %3 = vector.shape_cast %2 : vector<16xf32> to vector<16x1xf32>
    %4 = tpu.iota {dimensions = array<i32: 1>} : vector<1x32xi32>
    %5 = vector.broadcast %4 : vector<1x32xi32> to vector<16x32xi32>
    %6 = vector.broadcast %1 : vector<16x1xi32> to vector<16x32xi32>
    %7 = arith.cmpi eq, %5, %6 : vector<16x32xi32>
    %c0_i32 = arith.constant 0 : i32
    %8 = arith.sitofp %c0_i32 : i32 to f32
    %9 = vector.broadcast %8 : f32 to vector<16x32xf32>
    %10 = arith.select %7, %0, %9 : vector<16x32xi1>, vector<16x32xf32>
    %cst_3 = arith.constant dense<0.000000e+00> : vector<16xf32>
    %11 = vector.multi_reduction <add>, %10, %cst_3 [1] : vector<16x32xf32> to vector<16xf32>
    %12 = vector.shape_cast %11 : vector<16xf32> to vector<16x1xf32>
    %13 = vector.broadcast %3 : vector<16x1xf32> to vector<16x32xf32>
    %14 = arith.subf %0, %13 : vector<16x32xf32>
    %15 = math.exp %14 : vector<16x32xf32>
    %cst_4 = arith.constant dense<0.000000e+00> : vector<16xf32>
    %16 = vector.multi_reduction <add>, %15, %cst_4 [1] : vector<16x32xf32> to vector<16xf32>
    %17 = vector.shape_cast %16 : vector<16xf32> to vector<16x1xf32>
    %18 = math.log %17 : vector<16x1xf32>
    %19 = arith.addf %3, %18 : vector<16x1xf32>
    %20 = arith.subf %19, %12 : vector<16x1xf32>
    %c0_i32_5 = arith.constant 0 : i32
    %21 = vector.broadcast %c0_i32_5 : i32 to vector<16x1xi32>
    %22 = arith.cmpi sge, %1, %21 : vector<16x1xi32>
    %cst_6 = arith.constant 0.000000e+00 : f32
    %23 = vector.broadcast %cst_6 : f32 to vector<16x1xf32>
    %24 = arith.select %22, %20, %23 : vector<16x1xi1>, vector<16x1xf32>
    %cst_7 = arith.constant dense<0.000000e+00> : vector<1xf32>
    %25 = vector.multi_reduction <add>, %24, %cst_7 [0] : vector<16x1xf32> to vector<1xf32>
    %26 = vector.shape_cast %25 : vector<1xf32> to vector<1x1xf32>
    %c0_8 = arith.constant 0 : index
    %c0_9 = arith.constant 0 : index
    %27 = vector.load %arg3[%c0_8, %c0_9] : memref<1x1xf32, #tpu.memory_space<vmem>>, vector<1x1xf32>
    tpu.vector_store %arg3[%c0_8, %c0_9], %26 {strides = array<i32>} : memref<1x1xf32, #tpu.memory_space<vmem>>, vector<1x1xf32>,
    return
  }
  func.func @transform_0(%arg0: i32) -> (i32, i32) {
    %c0_i32 = arith.constant 0 : i32
    %c0_i32_0 = arith.constant 0 : i32
    return %arg0, %c0_i32 : i32, i32
  }
  func.func @transform_1(%arg0: i32) -> (i32, i32) {
    %c0_i32 = arith.constant 0 : i32
    %c0_i32_0 = arith.constant 0 : i32
    return %arg0, %c0_i32 : i32, i32
  }
  func.func @transform_2(%arg0: i32) -> (i32, i32) {
    %c0_i32 = arith.constant 0 : i32
    %c0_i32_0 = arith.constant 0 : i32
    return %arg0, %c0_i32 : i32, i32
  }
}

</mosaic_0001>

<llo_original>
// kernel: tpu_custom_call.1
$region0: #{tpu_custom_call.1}
  #allocation0 [shape = 'u32[]', space=smem, size = 0x4, offset = 0x4, fixed_abs, tag = 'smem constant byte address 0x4 - core index']
  #allocation1 [shape = 'u32[144,128]{1,0:T(1,128)}', space=vmem, size = 0x12000, scoped, tag = 'internal scratch']
  %s0 = inlined_call_operand.vmem [shape: f32[16,32], index: 0, kind: input, shape index: {}]
  %s1 = inlined_call_operand.vmem [shape: s32[16,1], index: 1, kind: input, shape index: {}]
  %s2 = inlined_call_operand.hbm [shape: f32[1,1], index: 2, kind: output, shape index: {}]
  %s3 = sld [smem:[#allocation0]]
  $region18: #{tpu_custom_call.1} parent=0
    _
  %s5 = ssub.s32 1, %s3
  %s6 = scalar_select 0, %s5, %s3
  $region1: #{tpu_custom_call.1} parent=0
    #allocation2 [shape = 'u8[512]{0}', space=vmem, size = 0x400, scoped, tag = 'output window, operand 0, single buffered']
    #allocation3 [shape = 's32[1]{0}', space=sflag, size = 0x4, scoped, tag = 'scoped memory for tpu_custom_call.1']
    %7 = vsyncpa [#allocation3], 0
    // Predicated region
    $region2: #{tpu_custom_call.1} parent=1 // pred_check
      _
    $region3: #{tpu_custom_call.1} parent=1 // pred_check_branch
      %9 = sbr.rel (0) target = $region5
    $region4: #{tpu_custom_call.1} parent=1 // pred_region
      _
    $region5: #{tpu_custom_call.1} parent=1 // pred_fallthru
      _
    // Predicated region
    $region6: #{tpu_custom_call.1} parent=1 // pred_check
      _
    $region7: #{tpu_custom_call.1} parent=1 // pred_check_branch
      %11 = sbr.rel (0) target = $region9
    $region8: #{tpu_custom_call.1} parent=1 // pred_region
      _
    $region9: #{tpu_custom_call.1} parent=1 // pred_fallthru
      _
    %v12 = vld [vmem:[%s0] sm:$0xff]
    %v13 = vld [vmem:[%s0 + $0x8] sm:$0xff]
    %v14 = vld [vmem:[%s1] sm:$0xff]
    %v15 = vld [vmem:[%s1 + $0x8] sm:$0xff]
    %vm16 = vcmask 261120
    %v17 = vsel %vm16, %v12, -inf
    %18 = vmax.xlane.f32.xlu0 %v17
    %v19 = vpop.xlane.xlu0 %18
    %v20 = vsel %vm16, %v13, -inf
    %21 = vmax.xlane.f32.xlu0 %v20
    %v22 = vpop.xlane.xlu0 %21
    %v23 = vlaneseq
    %v24 = vand.u32 %v23, 127
    %25 = vset.pattern.permute.xlu0 0
    %26 = vperm.xlu0 %25, %v14
    %v27 = vpop.permute.xlu0 %26
    %28 = vset.pattern.permute.xlu0 0
    %29 = vperm.xlu0 %28, %v15
    %v30 = vpop.permute.xlu0 %29
    %vm31 = vcmp.eq.s32.totalorder %v24, %v27
    %vm32 = vcmp.eq.s32.totalorder %v24, %v30
    %v33 = vsel %vm31, %v12, 0.0
    %v34 = vsel %vm32, %v13, 0.0
    %v35 = vsel %vm16, %v33, 0.0
    %36 = vadd.xlane.f32.xlu0 %v35
    %v37 = vpop.xlane.xlu0 %36
    %v38 = vsel %vm16, %v34, 0.0
    %39 = vadd.xlane.f32.xlu0 %v38
    %v40 = vpop.xlane.xlu0 %39
    %v41 = vsub.f32 %v12, %v19
    %v42 = vsub.f32 %v13, %v22
    %v43 = vmul.f32 %v41, 1.442695
    %v44 = vpow.pop %v43
    %v45 = vmul.f32 %v42, 1.442695
    %v46 = vpow.pop %v45
    %v47 = vsel %vm16, %v44, 0.0
    %48 = vadd.xlane.f32.xlu0 %v47
    %v49 = vpop.xlane.xlu0 %48
    %v50 = vsel %vm16, %v46, 0.0
    %51 = vadd.xlane.f32.xlu0 %v50
    %v52 = vpop.xlane.xlu0 %51
    %v53 = vlog2.pop %v49
    %v54 = vmul.f32 %v53, 0.6931472
    %v55 = vlog2.pop %v52
    %v56 = vmul.f32 %v55, 0.6931472
    %v57 = vadd.f32 %v19, %v54
    %v58 = vadd.f32 %v22, %v56
    %v59 = vsub.f32 %v57, %v37
    %v60 = vsub.f32 %v58, %v40
    %vm61 = vcmp.ge.s32.totalorder %v14, 0
    %vm62 = vcmp.ge.s32.totalorder %v15, 0
    %v63 = vsel %vm61, %v59, 0.0
    %v64 = vsel %vm62, %v60, 0.0
    %vm65 = vcmask 7168
    %v66 = vsel %vm65, %v63, 0.0
    %v67 = vsel %vm65, %v64, 0.0
    %v68 = vadd.f32 %v66, %v67
    %v69 = vrot.slane %v68, 4
    %v70 = vadd.f32 %v68, %v69
    %v71 = vrot.slane %v70, 2
    %v72 = vadd.f32 %v70, %v71
    %v73 = vrot.slane %v72, 1
    %v74 = vadd.f32 %v72, %v73
    %vm75 = vcmask 0
    %76 = vst.msk [vmem:[#allocation2] sm:$0x1] %vm75, %v74
    // Predicated region
    $region10: #{tpu_custom_call.1} parent=1 // pred_check
      _
    $region11: #{tpu_custom_call.1} parent=1 // pred_check_branch
      %78 = sbr.rel (0) target = $region13
    $region12: #{tpu_custom_call.1} parent=1 // pred_region
      %s80 = ssub.s32 16, 16
      %81 = vsyncadd [#allocation3], %s80
      %s83 = sshll.u32 [#allocation2], 4
      %s84 = int_to_ptr.vmem [resolvable:$true] %s83
      %86 = dma.vmem_to_hbm [thread:$0]  %s84, 16, %s2, [#allocation3]
    $region13: #{tpu_custom_call.1} parent=1 // pred_fallthru
      _
    // Predicated region
    $region14: #{tpu_custom_call.1} parent=1 // pred_check
      _
    $region15: #{tpu_custom_call.1} parent=1 // pred_check_branch
      %88 = sbr.rel (0) target = $region17
    $region16: #{tpu_custom_call.1} parent=1 // pred_region
      %89 = dma.done [#allocation3], 16
    $region17: #{tpu_custom_call.1} parent=1 // pred_fallthru
      _
    %90 = vsyncpa [#allocation3], 1

</llo_original>
